<compile_context>
chip_gen: v6e
topology: v6e:2x2x1
jax: 0.10.0
libtpu: 0.0.40
codegen_flags: <defaults>
</compile_context>

<pallas_src>
import functools

import jax
import jax.numpy as jnp
from jax.experimental import pallas as pl
from jax.experimental.pallas import tpu as pltpu

BN_EPS = 1e-5
LANE = 128   # lane width (last-dim alignment for dense stores)
SUB = 16     # bf16 sublane packing (second-minor alignment for the batch dim)


def _round_up(n, m):
    return (n + m - 1) // m * m


def _fc_head_kernel(x_ref, w1_ref, b1_ref, w2_ref, b2_ref, w3_ref, b3_ref, o_ref):
    # Cast to bf16 in-kernel (avoids a separate pad/cast HBM pass outside).
    x = x_ref[...].astype(jnp.bfloat16)

    # fc1 (+ folded bn1) + relu      (dropout == identity in eval)
    h = jnp.dot(x, w1_ref[...], preferred_element_type=jnp.float32)
    h = jnp.maximum(h + b1_ref[...], 0.0)

    # fc2 (+ folded bn2) + relu      (dropout == identity in eval)
    h = jnp.dot(h.astype(jnp.bfloat16), w2_ref[...],
                preferred_element_type=jnp.float32)
    h = jnp.maximum(h + b2_ref[...], 0.0)

    # fc3 (lane-dense padded output columns)
    o = jnp.dot(h.astype(jnp.bfloat16), w3_ref[...],
                preferred_element_type=jnp.float32)
    o_ref[...] = (o + b3_ref[...]).astype(o_ref.dtype)


@functools.partial(jax.jit, static_argnames=("num_classes", "tile_b", "out_dtype"))
def fc_head_net(x, prepared, *, num_classes, tile_b=512, out_dtype=jnp.float32):
    """x: (B, num_features). prepared: output of prepare_params()."""
    B, F = x.shape
    assert F == prepared["w1"].shape[0], "feature dim mismatch vs prepared params"
    H1 = prepared["w1"].shape[1]          # 256
    H2 = prepared["w2"].shape[1]          # 128
    C_pad = prepared["w3"].shape[1]       # num_classes padded to 128

    # --- batch tile selection -------------------------------------------------
    # Multiple of the bf16 sublane count (16), capped at tile_b; when the whole
    # (rounded) batch fits in a single tile but is >= 2 sublane groups, split it
    # into >=2 grid steps so v7x's two TensorCores both get work.
    tile_b = max(SUB, _round_up(int(tile_b), SUB))
    b_ceil = _round_up(max(B, 1), SUB)
    tile = min(tile_b, b_ceil)
    if tile >= b_ceil and b_ceil >= 2 * SUB:
        tile = _round_up(b_ceil // 2, SUB)
    B_pad = _round_up(B, tile)
    grid = (B_pad // tile,)

    # Only pad batch rows (no feature padding, no dtype pre-pass).
    x_p = x if B_pad == B else jnp.pad(x, ((0, B_pad - B), (0, 0)))

    # --- explicit VMEM budget -------------------------------------------------
    out_itemsize = jnp.dtype(out_dtype).itemsize
    param_bytes = sum(int(v.size) * v.dtype.itemsize for v in prepared.values())
    x_bytes = 2 * tile * F * x.dtype.itemsize            # activation double-buffer
    o_bytes = 2 * tile * C_pad * out_itemsize             # output double-buffer
    h_bytes = tile * (H1 + H2) * 4                        # f32 intermediates
    vmem_limit = int(1.5 * (x_bytes + param_bytes + o_bytes + h_bytes)) + (2 << 20)
    vmem_limit = max(8 << 20, min(vmem_limit, 40 << 20))  # fits v7x's 64 MiB VMEM

    cost = pl.CostEstimate(
        flops=2 * B_pad * (F * H1 + H1 * H2 + H2 * C_pad),
        transcendentals=0,
        bytes_accessed=int(x_p.size) * x.dtype.itemsize + param_bytes
                       + B_pad * C_pad * out_itemsize,
    )

    const = lambda i: (0, 0)  # weights: DMA'd once, VMEM-resident, single buffer
    resident = pl.Buffered(1)

    out = pl.pallas_call(
        _fc_head_kernel,
        out_shape=jax.ShapeDtypeStruct((B_pad, C_pad), out_dtype),
        grid=grid,
        in_specs=[
            pl.BlockSpec((tile, F), lambda i: (i, 0)),
            pl.BlockSpec(prepared["w1"].shape, const, pipeline_mode=resident),
            pl.BlockSpec(prepared["b1"].shape, const, pipeline_mode=resident),
            pl.BlockSpec(prepared["w2"].shape, const, pipeline_mode=resident),
            pl.BlockSpec(prepared["b2"].shape, const, pipeline_mode=resident),
            pl.BlockSpec(prepared["w3"].shape, const, pipeline_mode=resident),
            pl.BlockSpec(prepared["b3"].shape, const, pipeline_mode=resident),
        ],
        out_specs=pl.BlockSpec((tile, C_pad), lambda i: (i, 0)),
        compiler_params=pltpu.CompilerParams(
            dimension_semantics=("parallel",),
            vmem_limit_bytes=vmem_limit,
        ),
        cost_estimate=cost,
    )(x_p, prepared["w1"], prepared["b1"], prepared["w2"], prepared["b2"],
      prepared["w3"], prepared["b3"])

    return out[:B, :num_classes]


def prepare_params(p, num_features, num_classes):
    """One-time offline transform: fold BN running-stats + linear bias into the
    weights, pad the class dim to a lane (128) multiple, cast weights to bf16."""
    scale1 = p["g1"] * jax.lax.rsqrt(p["v1"] + BN_EPS)            # (1, 256)
    w1 = p["w1"] * scale1
    b1 = (p["b1"] - p["m1"]) * scale1 + p["be1"]

    scale2 = p["g2"] * jax.lax.rsqrt(p["v2"] + BN_EPS)            # (1, 128)
    w2 = p["w2"] * scale2
    b2 = (p["b2"] - p["m2"]) * scale2 + p["be2"]

    C_pad = _round_up(num_classes, LANE)
    w3 = jnp.pad(p["w3"], ((0, 0), (0, C_pad - num_classes)))     # zero-filled
    b3 = jnp.pad(p["b3"], ((0, 0), (0, C_pad - num_classes)))     # zero-filled

    assert p["w1"].shape[0] == num_features
    # TODO(synk): on v7x, w1 could be stored as fp8 to halve its resident VMEM
    # footprint (accuracy permitting); kept bf16 since v5e/v6e MXUs lack fp8.
    return dict(
        w1=w1.astype(jnp.bfloat16), b1=b1.astype(jnp.float32),
        w2=w2.astype(jnp.bfloat16), b2=b2.astype(jnp.float32),
        w3=w3.astype(jnp.bfloat16), b3=b3.astype(jnp.float32),
    )


def init_params(key, num_features, num_classes):
    """Deterministic synthetic parameters matching FCHeadNet.__init__ shapes."""
    ks = jax.random.split(key, 14)

    def lin(kw, kb, fan_in, fan_out):
        bound = 1.0 / jnp.sqrt(fan_in)
        w = jax.random.uniform(kw, (fan_in, fan_out), jnp.float32, -bound, bound)
        b = jax.random.uniform(kb, (1, fan_out), jnp.float32, -bound, bound)
        return w, b

    w1, b1 = lin(ks[0], ks[1], num_features, 256)
    w2, b2 = lin(ks[2], ks[3], 256, 128)
    w3, b3 = lin(ks[4], ks[5], 128, num_classes)

    def bn(kg, kb, km, kv, n):
        g = 1.0 + 0.1 * jax.random.normal(kg, (1, n), jnp.float32)
        be = 0.1 * jax.random.normal(kb, (1, n), jnp.float32)
        m = 0.1 * jax.random.normal(km, (1, n), jnp.float32)
        v = jax.random.uniform(kv, (1, n), jnp.float32, 0.5, 1.5)
        return g, be, m, v

    g1, be1, m1, v1 = bn(ks[6], ks[7], ks[8], ks[9], 256)
    g2, be2, m2, v2 = bn(ks[10], ks[11], ks[12], ks[13], 128)

    return dict(w1=w1, b1=b1, g1=g1, be1=be1, m1=m1, v1=v1,
                w2=w2, b2=b2, g2=g2, be2=be2, m2=m2, v2=v2,
                w3=w3, b3=b3)


def _reference(x, p):
    """Pure-JAX f32 eval-mode forward of FCHeadNet (unfolded BN)."""
    h = x @ p["w1"] + p["b1"]
    h = (h - p["m1"]) * (p["g1"] / jnp.sqrt(p["v1"] + BN_EPS)) + p["be1"]
    h = jnp.maximum(h, 0.0)
    h = h @ p["w2"] + p["b2"]
    h = (h - p["m2"]) * (p["g2"] / jnp.sqrt(p["v2"] + BN_EPS)) + p["be2"]
    h = jnp.maximum(h, 0.0)
    return h @ p["w3"] + p["b3"]


if __name__ == "__main__":
    key = jax.random.PRNGKey(0)
    kx, kp = jax.random.split(key)

    batch, num_features, num_classes = 8, 32, 10
    x = jax.random.normal(kx, (batch, num_features), jnp.float32)
    params = init_params(kp, num_features, num_classes)
    prepared = prepare_params(params, num_features, num_classes)

    out = fc_head_net(x, prepared, num_classes=num_classes)
    out = jax.block_until_ready(out)

    ref = _reference(x, params)
    assert out.shape == (batch, num_classes)
    assert out.dtype == jnp.float32
    # bf16 MXU inputs/weights with f32 accumulation -> loosened tolerance vs f32 ref.
    assert jnp.allclose(out, ref, atol=5e-2, rtol=5e-2), "mismatch vs reference"

    print("KERNEL_OK")
</pallas_src>

<mosaic_0001>
module attributes {stable_mosaic.version = 11 : i64} {
  func.func @_fc_head_kernel(%arg0: i32, %arg1: memref<16x32xf32, #tpu.memory_space<vmem>>, %arg2: memref<32x256xbf16, #tpu.memory_space<vmem>>, %arg3: memref<1x256xf32, #tpu.memory_space<vmem>>, %arg4: memref<256x128xbf16, #tpu.memory_space<vmem>>, %arg5: memref<1x128xf32, #tpu.memory_space<vmem>>, %arg6: memref<128x128xbf16, #tpu.memory_space<vmem>>, %arg7: memref<1x128xf32, #tpu.memory_space<vmem>>, %arg8: memref<16x128xf32, #tpu.memory_space<vmem>>) attributes {dimension_semantics = [#tpu.dimension_semantics<parallel>], iteration_bounds = array<i64: 1>, scalar_prefetch = 0 : i64, scratch_operands = 0 : i64, tpu.core_type = #tpu.core_type<tc>, window_params = [{transform_indices = @transform_0, window_bounds = array<i64: 16, 32>}, {pipeline_mode = #tpu.pipeline_mode<synchronous>, transform_indices = @transform_1, window_bounds = array<i64: 32, 256>}, {pipeline_mode = #tpu.pipeline_mode<synchronous>, transform_indices = @transform_2, window_bounds = array<i64: 1, 256>}, {pipeline_mode = #tpu.pipeline_mode<synchronous>, transform_indices = @transform_3, window_bounds = array<i64: 256, 128>}, {pipeline_mode = #tpu.pipeline_mode<synchronous>, transform_indices = @transform_4, window_bounds = array<i64: 1, 128>}, {pipeline_mode = #tpu.pipeline_mode<synchronous>, transform_indices = @transform_5, window_bounds = array<i64: 128, 128>}, {pipeline_mode = #tpu.pipeline_mode<synchronous>, transform_indices = @transform_6, window_bounds = array<i64: 1, 128>}, {transform_indices = @transform_7, window_bounds = array<i64: 16, 128>}]} {
    %c0 = arith.constant 0 : index
    %c0_0 = arith.constant 0 : index
    %0 = vector.load %arg1[%c0, %c0_0] : memref<16x32xf32, #tpu.memory_space<vmem>>, vector<16x32xf32>
    %1 = arith.truncf %0 : vector<16x32xf32> to vector<16x32xbf16>
    %c0_1 = arith.constant 0 : index
    %c0_2 = arith.constant 0 : index
    %2 = vector.load %arg2[%c0_1, %c0_2] : memref<32x256xbf16, #tpu.memory_space<vmem>>, vector<32x256xbf16>
    %cst = arith.constant dense<0.000000e+00> : vector<16x256xf32>
    %3 = tpu.matmul %1, %2, %cst {dimension_numbers = #tpu.dot_dimension_numbers<[1], [0], [0], [1], [0, 0, 1, 1], [], []>} : vector<16x32xbf16>, vector<32x256xbf16>, vector<16x256xf32> -> vector<16x256xf32>
    %c0_3 = arith.constant 0 : index
    %c0_4 = arith.constant 0 : index
    %4 = vector.load %arg3[%c0_3, %c0_4] : memref<1x256xf32, #tpu.memory_space<vmem>>, vector<1x256xf32>
    %5 = vector.broadcast %4 : vector<1x256xf32> to vector<16x256xf32>
    %6 = arith.addf %3, %5 : vector<16x256xf32>
    %cst_5 = arith.constant 0.000000e+00 : f32
    %7 = vector.broadcast %cst_5 : f32 to vector<16x256xf32>
    %8 = arith.maximumf %6, %7 : vector<16x256xf32>
    %9 = arith.truncf %8 : vector<16x256xf32> to vector<16x256xbf16>
    %c0_6 = arith.constant 0 : index
    %c0_7 = arith.constant 0 : index
    %10 = vector.load %arg4[%c0_6, %c0_7] : memref<256x128xbf16, #tpu.memory_space<vmem>>, vector<256x128xbf16>
    %cst_8 = arith.constant dense<0.000000e+00> : vector<16x128xf32>
    %11 = tpu.matmul %9, %10, %cst_8 {dimension_numbers = #tpu.dot_dimension_numbers<[1], [0], [0], [1], [0, 0, 1, 1], [], []>} : vector<16x256xbf16>, vector<256x128xbf16>, vector<16x128xf32> -> vector<16x128xf32>
    %c0_9 = arith.constant 0 : index
    %c0_10 = arith.constant 0 : index
    %12 = vector.load %arg5[%c0_9, %c0_10] : memref<1x128xf32, #tpu.memory_space<vmem>>, vector<1x128xf32>
    %13 = vector.broadcast %12 : vector<1x128xf32> to vector<16x128xf32>
    %14 = arith.addf %11, %13 : vector<16x128xf32>
    %cst_11 = arith.constant 0.000000e+00 : f32
    %15 = vector.broadcast %cst_11 : f32 to vector<16x128xf32>
    %16 = arith.maximumf %14, %15 : vector<16x128xf32>
    %17 = arith.truncf %16 : vector<16x128xf32> to vector<16x128xbf16>
    %c0_12 = arith.constant 0 : index
    %c0_13 = arith.constant 0 : index
    %18 = vector.load %arg6[%c0_12, %c0_13] : memref<128x128xbf16, #tpu.memory_space<vmem>>, vector<128x128xbf16>
    %cst_14 = arith.constant dense<0.000000e+00> : vector<16x128xf32>
    %19 = tpu.matmul %17, %18, %cst_14 {dimension_numbers = #tpu.dot_dimension_numbers<[1], [0], [0], [1], [0, 0, 1, 1], [], []>} : vector<16x128xbf16>, vector<128x128xbf16>, vector<16x128xf32> -> vector<16x128xf32>
    %c0_15 = arith.constant 0 : index
    %c0_16 = arith.constant 0 : index
    %20 = vector.load %arg7[%c0_15, %c0_16] : memref<1x128xf32, #tpu.memory_space<vmem>>, vector<1x128xf32>
    %21 = vector.broadcast %20 : vector<1x128xf32> to vector<16x128xf32>
    %22 = arith.addf %19, %21 : vector<16x128xf32>
    %c0_17 = arith.constant 0 : index
    %c0_18 = arith.constant 0 : index
    %23 = vector.load %arg8[%c0_17, %c0_18] : memref<16x128xf32, #tpu.memory_space<vmem>>, vector<16x128xf32>
    tpu.vector_store %arg8[%c0_17, %c0_18], %22 {strides = array<i32>} : memref<16x128xf32, #tpu.memory_space<vmem>>, vector<16x128xf32>,
    return
  }
  func.func @transform_0(%arg0: i32) -> (i32, i32) {
    %c0_i32 = arith.constant 0 : i32
    %c0_i32_0 = arith.constant 0 : i32
    return %arg0, %c0_i32 : i32, i32
  }
  func.func @transform_1(%arg0: i32) -> (i32, i32) {
    %c0_i32 = arith.constant 0 : i32
    %c0_i32_0 = arith.constant 0 : i32
    %c0_i32_1 = arith.constant 0 : i32
    return %c0_i32, %c0_i32_0 : i32, i32
  }
  func.func @transform_2(%arg0: i32) -> (i32, i32) {
    %c0_i32 = arith.constant 0 : i32
    %c0_i32_0 = arith.constant 0 : i32
    %c0_i32_1 = arith.constant 0 : i32
    return %c0_i32, %c0_i32_0 : i32, i32
  }
  func.func @transform_3(%arg0: i32) -> (i32, i32) {
    %c0_i32 = arith.constant 0 : i32
    %c0_i32_0 = arith.constant 0 : i32
    %c0_i32_1 = arith.constant 0 : i32
    return %c0_i32, %c0_i32_0 : i32, i32
  }
  func.func @transform_4(%arg0: i32) -> (i32, i32) {
    %c0_i32 = arith.constant 0 : i32
    %c0_i32_0 = arith.constant 0 : i32
    %c0_i32_1 = arith.constant 0 : i32
    return %c0_i32, %c0_i32_0 : i32, i32
  }
  func.func @transform_5(%arg0: i32) -> (i32, i32) {
    %c0_i32 = arith.constant 0 : i32
    %c0_i32_0 = arith.constant 0 : i32
    %c0_i32_1 = arith.constant 0 : i32
    return %c0_i32, %c0_i32_0 : i32, i32
  }
  func.func @transform_6(%arg0: i32) -> (i32, i32) {
    %c0_i32 = arith.constant 0 : i32
    %c0_i32_0 = arith.constant 0 : i32
    %c0_i32_1 = arith.constant 0 : i32
    return %c0_i32, %c0_i32_0 : i32, i32
  }
  func.func @transform_7(%arg0: i32) -> (i32, i32) {
    %c0_i32 = arith.constant 0 : i32
    %c0_i32_0 = arith.constant 0 : i32
    return %arg0, %c0_i32 : i32, i32
  }
}

</mosaic_0001>

<llo_original>
// kernel: fc_head_net.1
$region0: #{fc_head_net.1}
  #allocation0 [shape = 'u32[]', space=smem, size = 0x4, offset = 0x4, fixed_abs, tag = 'smem constant byte address 0x4 - core index']
  #allocation1 [shape = 'u32[144,128]{1,0:T(1,128)}', space=vmem, size = 0x12000, scoped, tag = 'internal scratch']
  %s0 = inlined_call_operand.vmem [shape: f32[16,32], index: 0, kind: input, shape index: {}]
  %s1 = inlined_call_operand.vmem [shape: bf16[32,256], index: 1, kind: input, shape index: {}]
  %s2 = inlined_call_operand.hbm [shape: f32[1,256], index: 2, kind: input, shape index: {}]
  %s3 = inlined_call_operand.hbm [shape: bf16[256,128], index: 3, kind: input, shape index: {}]
  %s4 = inlined_call_operand.hbm [shape: f32[1,128], index: 4, kind: input, shape index: {}]
  %s5 = inlined_call_operand.hbm [shape: bf16[128,128], index: 5, kind: input, shape index: {}]
  %s6 = inlined_call_operand.hbm [shape: f32[1,128], index: 6, kind: input, shape index: {}]
  %s7 = inlined_call_operand.vmem [shape: f32[16,128], index: 7, kind: output, shape index: {}]
  %s8 = sld [smem:[#allocation0]]
  $region58: #{fc_head_net.1} parent=0
    _
  %s10 = ssub.s32 1, %s8
  %s11 = scalar_select 0, %s10, %s8
  $region1: #{fc_head_net.1} parent=0
    #allocation2 [shape = 'u8[1024]{0}', space=vmem, size = 0x400, scoped, tag = 'input window, operand 2, single buffered']
    #allocation3 [shape = 's32[1]{0}', space=sflag, size = 0x4, scoped, tag = 'scoped memory for fc_head_net.1']
    #allocation4 [shape = 'u8[65536]{0}', space=vmem, size = 0x10000, scoped, tag = 'input window, operand 3, single buffered']
    #allocation5 [shape = 's32[1]{0}', space=sflag, size = 0x4, scoped, tag = 'scoped memory for fc_head_net.1']
    #allocation6 [shape = 'u8[512]{0}', space=vmem, size = 0x400, scoped, tag = 'input window, operand 4, single buffered']
    #allocation7 [shape = 'u8[32768]{0}', space=vmem, size = 0x8000, scoped, tag = 'input window, operand 5, single buffered']
    #allocation8 [shape = 's32[1]{0}', space=sflag, size = 0x4, scoped, tag = 'scoped memory for fc_head_net.1']
    #allocation9 [shape = 'u8[512]{0}', space=vmem, size = 0x400, scoped, tag = 'input window, operand 6, single buffered']
    %12 = vsyncpa [#allocation3], 0
    %13 = vsyncpa [#allocation5], 0
    %14 = vsyncpa [#allocation8], 0
    // Predicated region
    $region2: #{fc_head_net.1} parent=1 // pred_check
      _
    $region3: #{fc_head_net.1} parent=1 // pred_check_branch
      %16 = sbr.rel (0) target = $region5
    $region4: #{fc_head_net.1} parent=1 // pred_region
      _
    $region5: #{fc_head_net.1} parent=1 // pred_fallthru
      _
    // Predicated region
    $region6: #{fc_head_net.1} parent=1 // pred_check
      _
    $region7: #{fc_head_net.1} parent=1 // pred_check_branch
      %18 = sbr.rel (0) target = $region9
    $region8: #{fc_head_net.1} parent=1 // pred_region
      _
    $region9: #{fc_head_net.1} parent=1 // pred_fallthru
      _
    // Predicated region
    $region10: #{fc_head_net.1} parent=1 // pred_check
      _
    $region11: #{fc_head_net.1} parent=1 // pred_check_branch
      %20 = sbr.rel (0) target = $region13
    $region12: #{fc_head_net.1} parent=1 // pred_region
      %s22 = ssub.s32 32, 32
      %23 = vsyncadd [#allocation3], %s22
      %s25 = sshll.u32 [#allocation2], 4
      %s26 = int_to_ptr.vmem [resolvable:$true] %s25
      %28 = dma.hbm_to_vmem [thread:$0]  %s2, 32, %s26, [#allocation3]
    $region13: #{fc_head_net.1} parent=1 // pred_fallthru
      _
    // Predicated region
    $region14: #{fc_head_net.1} parent=1 // pred_check
      _
    $region15: #{fc_head_net.1} parent=1 // pred_check_branch
      %30 = sbr.rel (0) target = $region17
    $region16: #{fc_head_net.1} parent=1 // pred_region
      %s32 = ssub.s32 2048, 2048
      %33 = vsyncadd [#allocation5], %s32
      %s34 = sshll.u32 [#allocation4], 4
      %s35 = int_to_ptr.vmem [resolvable:$true] %s34
      %40 = dma.hbm_to_vmem [thread:$0]  %s3, 2048, %s35, [#allocation5], 64, 64, 4
    $region17: #{fc_head_net.1} parent=1 // pred_fallthru
      _
    // Predicated region
    $region18: #{fc_head_net.1} parent=1 // pred_check
      _
    $region19: #{fc_head_net.1} parent=1 // pred_check_branch
      %42 = sbr.rel (0) target = $region21
    $region20: #{fc_head_net.1} parent=1 // pred_region
      %s44 = ssub.s32 16, 16
      %45 = vsyncadd [#allocation5], %s44
      %s47 = sshll.u32 [#allocation6], 4
      %s48 = int_to_ptr.vmem [resolvable:$true] %s47
      %50 = dma.hbm_to_vmem [thread:$0]  %s4, 16, %s48, [#allocation5]
    $region21: #{fc_head_net.1} parent=1 // pred_fallthru
      _
    // Predicated region
    $region22: #{fc_head_net.1} parent=1 // pred_check
      _
    $region23: #{fc_head_net.1} parent=1 // pred_check_branch
      %52 = sbr.rel (0) target = $region25
    $region24: #{fc_head_net.1} parent=1 // pred_region
      %s54 = ssub.s32 1024, 1024
      %55 = vsyncadd [#allocation8], %s54
      %s56 = sshll.u32 [#allocation7], 4
      %s57 = int_to_ptr.vmem [resolvable:$true] %s56
      %62 = dma.hbm_to_vmem [thread:$0]  %s5, 1024, %s57, [#allocation8], 64, 64, 4
    $region25: #{fc_head_net.1} parent=1 // pred_fallthru
      _
    // Predicated region
    $region26: #{fc_head_net.1} parent=1 // pred_check
      _
    $region27: #{fc_head_net.1} parent=1 // pred_check_branch
      %64 = sbr.rel (0) target = $region29
    $region28: #{fc_head_net.1} parent=1 // pred_region
      %s66 = ssub.s32 16, 16
      %67 = vsyncadd [#allocation8], %s66
      %s69 = sshll.u32 [#allocation9], 4
      %s70 = int_to_ptr.vmem [resolvable:$true] %s69
      %72 = dma.hbm_to_vmem [thread:$0]  %s6, 16, %s70, [#allocation8]
    $region29: #{fc_head_net.1} parent=1 // pred_fallthru
      _
    // Predicated region
    $region30: #{fc_head_net.1} parent=1 // pred_check
      _
    $region31: #{fc_head_net.1} parent=1 // pred_check_branch
      %74 = sbr.rel (0) target = $region33
    $region32: #{fc_head_net.1} parent=1 // pred_region
      %75 = dma.done [#allocation3], 32
    $region33: #{fc_head_net.1} parent=1 // pred_fallthru
      _
    // Predicated region
    $region34: #{fc_head_net.1} parent=1 // pred_check
      _
    $region35: #{fc_head_net.1} parent=1 // pred_check_branch
      %77 = sbr.rel (0) target = $region37
    $region36: #{fc_head_net.1} parent=1 // pred_region
      %78 = dma.done [#allocation5], 2048
    $region37: #{fc_head_net.1} parent=1 // pred_fallthru
      _
    // Predicated region
    $region38: #{fc_head_net.1} parent=1 // pred_check
      _
    $region39: #{fc_head_net.1} parent=1 // pred_check_branch
      %80 = sbr.rel (0) target = $region41
    $region40: #{fc_head_net.1} parent=1 // pred_region
      %81 = dma.done [#allocation5], 16
    $region41: #{fc_head_net.1} parent=1 // pred_fallthru
      _
    // Predicated region
    $region42: #{fc_head_net.1} parent=1 // pred_check
      _
    $region43: #{fc_head_net.1} parent=1 // pred_check_branch
      %83 = sbr.rel (0) target = $region45
    $region44: #{fc_head_net.1} parent=1 // pred_region
      %84 = dma.done [#allocation8], 1024
    $region45: #{fc_head_net.1} parent=1 // pred_fallthru
      _
    // Predicated region
    $region46: #{fc_head_net.1} parent=1 // pred_check
      _
    $region47: #{fc_head_net.1} parent=1 // pred_check_branch
      %86 = sbr.rel (0) target = $region49
    $region48: #{fc_head_net.1} parent=1 // pred_region
      %87 = dma.done [#allocation8], 16
    $region49: #{fc_head_net.1} parent=1 // pred_fallthru
      _
    %v89 = vld [vmem:[%s0] sm:$0xff]
    %v90 = vld [vmem:[%s0 + $0x8] sm:$0xff]
    %v91 = vpack.c.bf16 %v90, %v89
    %v92 = vld [vmem:[%s1] sm:$0xff]
    %v93 = vld [vmem:[%s1 + $0x8] sm:$0xff]
    %v94 = vld [vmem:[%s1 + $0x10] sm:$0xff]
    %v95 = vld [vmem:[%s1 + $0x18] sm:$0xff]
    %v96 = vld [vmem:[#allocation2] sm:$0x3]
    %v98 = vlaneseq
    %v99 = vshrl.u32 %v98, 7
    %v100 = vsub.s32 0, %v99
    %v101 = vrot.slane %v96, %v100
    %v102 = vlaneseq
    %v103 = vshrl.u32 %v102, 7
    %v104 = vsub.s32 1, %v103
    %v105 = vrot.slane %v96, %v104
    %v112 = vunpack.c.l.b16 %v92
    %v113 = vunpack.c.h.b16 %v92
    %v114 = vunpack.c.l.b16 %v93
    %v115 = vunpack.c.h.b16 %v93
    %v116 = vunpack.c.l.b16 %v94
    %v117 = vunpack.c.h.b16 %v94
    %v118 = vunpack.c.l.b16 %v95
    %v119 = vunpack.c.h.b16 %v95
    %v120 = vpack.c.b16 %v114, %v112
    %v121 = vpack.c.b16 %v115, %v113
    %v122 = vpack.c.b16 %v118, %v116
    %v123 = vpack.c.b16 %v119, %v117
    %vm128 = vcmask 261120
    %v130 = vsel %vm128, %v91, 0
    %132 = vmatprep.subr.bf16.mxu0 0
    %133 = vmatpush1.bf16.msra.mxu0 0
    %134 = vmatprep.subr.bf16.mxu0 0
    %135 = vmatpush1.bf16.msra.mxu0 0
    %136 = vmatprep.subr.bf16.mxu0 0
    %137 = vmatpush1.bf16.msra.mxu0 0
    %138 = vmatprep.subr.bf16.mxu0 0
    %139 = vmatpush1.bf16.msra.mxu0 0
    %140 = vmatprep.subr.bf16.mxu0 0
    %141 = vmatpush1.bf16.msra.mxu0 0
    %142 = vmatprep.subr.bf16.mxu0 0
    %143 = vmatpush1.bf16.msra.mxu0 0
    %144 = vmatprep.subr.bf16.mxu0 %v123
    %145 = vmatpush1.bf16.msra.mxu0 %v122
    %146 = vmatprep.subr.bf16.mxu0 %v121
    %147 = vmatpush1.bf16.msra.mxu0 %v120
    %148 = vmatprep.subr.bf16.mxu0 0
    %149 = vmatpush2.bf16.msra.mxu0 0
    %150 = vmatprep.subr.bf16.mxu0 0
    %151 = vmatpush2.bf16.msra.mxu0 0
    %152 = vmatprep.subr.bf16.mxu0 0
    %153 = vmatpush2.bf16.msra.mxu0 0
    %154 = vmatprep.subr.bf16.mxu0 0
    %155 = vmatpush2.bf16.msra.mxu0 0
    %156 = vmatprep.subr.bf16.mxu0 0
    %157 = vmatpush2.bf16.msra.mxu0 0
    %158 = vmatprep.subr.bf16.mxu0 0
    %159 = vmatpush2.bf16.msra.mxu0 0
    %160 = vmatprep.subr.bf16.mxu0 0
    %161 = vmatpush2.bf16.msra.mxu0 0
    %162 = vmatprep.subr.bf16.mxu0 0
    %163 = vmatpush2.bf16.msra.mxu0 0
    %164 = vmatprep.mubr.bf16.mxu0 0
    %165 = vmatmul.mubr.bf16.gmra.mxu0 %v130
    %v166 = vpop.f32.mrf.mxu0
    %v167 = vadd.f32 %v101, %v166
    %v168 = vpop.f32.mrf.mxu0
    %v169 = vadd.f32 %v105, %v168
    %v170 = vpop.f32.mrf.mxu0
    %v171 = vadd.f32 %v101, %v170
    %v172 = vpop.f32.mrf.mxu0
    %v173 = vadd.f32 %v105, %v172
    %174 = vdwg.mxu0
    %v175 = vmax.f32 %v167, 0.0
    %v176 = vmax.f32 %v169, 0.0
    %v177 = vmax.f32 %v171, 0.0
    %v178 = vmax.f32 %v173, 0.0
    %v179 = vpack.c.bf16 %v177, %v175
    %v180 = vpack.c.bf16 %v178, %v176
    %v181 = vld [vmem:[#allocation4] sm:$0xf]
    %v182 = vld [vmem:[#allocation4 + $0x4] sm:$0xf]
    %v183 = vld [vmem:[#allocation4 + $0x8] sm:$0xf]
    %v184 = vld [vmem:[#allocation4 + $0xc] sm:$0xf]
    %v185 = vld [vmem:[#allocation4 + $0x10] sm:$0xf]
    %v186 = vld [vmem:[#allocation4 + $0x14] sm:$0xf]
    %v187 = vld [vmem:[#allocation4 + $0x18] sm:$0xf]
    %v188 = vld [vmem:[#allocation4 + $0x1c] sm:$0xf]
    %v189 = vld [vmem:[#allocation4 + $0x20] sm:$0xf]
    %v190 = vld [vmem:[#allocation4 + $0x24] sm:$0xf]
    %v191 = vld [vmem:[#allocation4 + $0x28] sm:$0xf]
    %v192 = vld [vmem:[#allocation4 + $0x2c] sm:$0xf]
    %v193 = vld [vmem:[#allocation4 + $0x30] sm:$0xf]
    %v194 = vld [vmem:[#allocation4 + $0x34] sm:$0xf]
    %v195 = vld [vmem:[#allocation4 + $0x38] sm:$0xf]
    %v196 = vld [vmem:[#allocation4 + $0x3c] sm:$0xf]
    %v197 = vld [vmem:[#allocation4 + $0x40] sm:$0xf]
    %v198 = vld [vmem:[#allocation4 + $0x44] sm:$0xf]
    %v199 = vld [vmem:[#allocation4 + $0x48] sm:$0xf]
    %v200 = vld [vmem:[#allocation4 + $0x4c] sm:$0xf]
    %v201 = vld [vmem:[#allocation4 + $0x50] sm:$0xf]
    %v202 = vld [vmem:[#allocation4 + $0x54] sm:$0xf]
    %v203 = vld [vmem:[#allocation4 + $0x58] sm:$0xf]
    %v204 = vld [vmem:[#allocation4 + $0x5c] sm:$0xf]
    %v205 = vld [vmem:[#allocation4 + $0x60] sm:$0xf]
    %v206 = vld [vmem:[#allocation4 + $0x64] sm:$0xf]
    %v207 = vld [vmem:[#allocation4 + $0x68] sm:$0xf]
    %v208 = vld [vmem:[#allocation4 + $0x6c] sm:$0xf]
    %v209 = vld [vmem:[#allocation4 + $0x70] sm:$0xf]
    %v210 = vld [vmem:[#allocation4 + $0x74] sm:$0xf]
    %v211 = vld [vmem:[#allocation4 + $0x78] sm:$0xf]
    %v212 = vld [vmem:[#allocation4 + $0x7c] sm:$0xf]
    %v213 = vld [vmem:[#allocation6] sm:$0x1]
    %v215 = vlaneseq
    %v216 = vshrl.u32 %v215, 7
    %v217 = vsub.s32 0, %v216
    %v218 = vrot.slane %v213, %v217
    %v252 = vunpack.c.l.b16 %v181
    %v253 = vunpack.c.l.b16 %v182
    %v254 = vunpack.c.l.b16 %v183
    %v255 = vunpack.c.l.b16 %v184
    %v256 = vunpack.c.l.b16 %v185
    %v257 = vunpack.c.l.b16 %v186
    %v258 = vunpack.c.l.b16 %v187
    %v259 = vunpack.c.l.b16 %v188
    %v260 = vunpack.c.l.b16 %v189
    %v261 = vunpack.c.l.b16 %v190
    %v262 = vunpack.c.l.b16 %v191
    %v263 = vunpack.c.l.b16 %v192
    %v264 = vunpack.c.l.b16 %v193
    %v265 = vunpack.c.l.b16 %v194
    %v266 = vunpack.c.l.b16 %v195
    %v267 = vunpack.c.l.b16 %v196
    %v268 = vunpack.c.l.b16 %v197
    %v269 = vunpack.c.l.b16 %v198
    %v270 = vunpack.c.l.b16 %v199
    %v271 = vunpack.c.l.b16 %v200
    %v272 = vunpack.c.l.b16 %v201
    %v273 = vunpack.c.l.b16 %v202
    %v274 = vunpack.c.l.b16 %v203
    %v275 = vunpack.c.l.b16 %v204
    %v276 = vunpack.c.l.b16 %v205
    %v277 = vunpack.c.l.b16 %v206
    %v278 = vunpack.c.l.b16 %v207
    %v279 = vunpack.c.l.b16 %v208
    %v280 = vunpack.c.l.b16 %v209
    %v281 = vunpack.c.l.b16 %v210
    %v282 = vunpack.c.l.b16 %v211
    %v283 = vunpack.c.l.b16 %v212
    %v284 = vpack.c.b16 %v253, %v252
    %v285 = vpack.c.b16 %v255, %v254
    %v286 = vpack.c.b16 %v257, %v256
    %v287 = vpack.c.b16 %v259, %v258
    %v288 = vpack.c.b16 %v261, %v260
    %v289 = vpack.c.b16 %v263, %v262
    %v290 = vpack.c.b16 %v265, %v264
    %v291 = vpack.c.b16 %v267, %v266
    %v292 = vpack.c.b16 %v269, %v268
    %v293 = vpack.c.b16 %v271, %v270
    %v294 = vpack.c.b16 %v273, %v272
    %v295 = vpack.c.b16 %v275, %v274
    %v296 = vpack.c.b16 %v277, %v276
    %v297 = vpack.c.b16 %v279, %v278
    %v298 = vpack.c.b16 %v281, %v280
    %v299 = vpack.c.b16 %v283, %v282
    %316 = vmatprep.subr.bf16.mxu0 0
    %317 = vmatpush1.bf16.msra.mxu0 %v291
    %318 = vmatprep.subr.bf16.mxu0 0
    %319 = vmatpush1.bf16.msra.mxu0 %v290
    %320 = vmatprep.subr.bf16.mxu0 0
    %321 = vmatpush1.bf16.msra.mxu0 %v289
    %322 = vmatprep.subr.bf16.mxu0 0
    %323 = vmatpush1.bf16.msra.mxu0 %v288
    %324 = vmatprep.subr.bf16.mxu0 0
    %325 = vmatpush1.bf16.msra.mxu0 %v287
    %326 = vmatprep.subr.bf16.mxu0 0
    %327 = vmatpush1.bf16.msra.mxu0 %v286
    %328 = vmatprep.subr.bf16.mxu0 0
    %329 = vmatpush1.bf16.msra.mxu0 %v285
    %330 = vmatprep.subr.bf16.mxu0 0
    %331 = vmatpush1.bf16.msra.mxu0 %v284
    %332 = vmatprep.subr.bf16.mxu0 0
    %333 = vmatpush2.bf16.msra.mxu0 %v299
    %334 = vmatprep.subr.bf16.mxu0 0
    %335 = vmatpush2.bf16.msra.mxu0 %v298
    %336 = vmatprep.subr.bf16.mxu0 0
    %337 = vmatpush2.bf16.msra.mxu0 %v297
    %338 = vmatprep.subr.bf16.mxu0 0
    %339 = vmatpush2.bf16.msra.mxu0 %v296
    %340 = vmatprep.subr.bf16.mxu0 0
    %341 = vmatpush2.bf16.msra.mxu0 %v295
    %342 = vmatprep.subr.bf16.mxu0 0
    %343 = vmatpush2.bf16.msra.mxu0 %v294
    %344 = vmatprep.subr.bf16.mxu0 0
    %345 = vmatpush2.bf16.msra.mxu0 %v293
    %346 = vmatprep.subr.bf16.mxu0 0
    %347 = vmatpush2.bf16.msra.mxu0 %v292
    %348 = vmatprep.mubr.bf16.mxu0 %v180
    %349 = vmatmul.mubr.bf16.gmra.mxu0 %v179
    %v350 = vpop.f32.mrf.mxu0
    %v351 = vadd.f32 %v218, %v350
    %v352 = vpop.f32.mrf.mxu0
    %v353 = vpop.f32.mrf.mxu0
    %v354 = vadd.f32 %v218, %v353
    %v355 = vpop.f32.mrf.mxu0
    %356 = vdwg.mxu0
    %v357 = vmax.f32 %v351, 0.0
    %v358 = vmax.f32 %v354, 0.0
    %v359 = vpack.c.bf16 %v358, %v357
    %v360 = vld [vmem:[#allocation7] sm:$0xf]
    %v361 = vld [vmem:[#allocation7 + $0x4] sm:$0xf]
    %v362 = vld [vmem:[#allocation7 + $0x8] sm:$0xf]
    %v363 = vld [vmem:[#allocation7 + $0xc] sm:$0xf]
    %v364 = vld [vmem:[#allocation7 + $0x10] sm:$0xf]
    %v365 = vld [vmem:[#allocation7 + $0x14] sm:$0xf]
    %v366 = vld [vmem:[#allocation7 + $0x18] sm:$0xf]
    %v367 = vld [vmem:[#allocation7 + $0x1c] sm:$0xf]
    %v368 = vld [vmem:[#allocation7 + $0x20] sm:$0xf]
    %v369 = vld [vmem:[#allocation7 + $0x24] sm:$0xf]
    %v370 = vld [vmem:[#allocation7 + $0x28] sm:$0xf]
    %v371 = vld [vmem:[#allocation7 + $0x2c] sm:$0xf]
    %v372 = vld [vmem:[#allocation7 + $0x30] sm:$0xf]
    %v373 = vld [vmem:[#allocation7 + $0x34] sm:$0xf]
    %v374 = vld [vmem:[#allocation7 + $0x38] sm:$0xf]
    %v375 = vld [vmem:[#allocation7 + $0x3c] sm:$0xf]
    %v376 = vld [vmem:[#allocation9] sm:$0x1]
    %v378 = vlaneseq
    %v379 = vshrl.u32 %v378, 7
    %v380 = vsub.s32 0, %v379
    %v381 = vrot.slane %v376, %v380
    %v399 = vunpack.c.l.b16 %v360
    %v400 = vunpack.c.l.b16 %v361
    %v401 = vunpack.c.l.b16 %v362
    %v402 = vunpack.c.l.b16 %v363
    %v403 = vunpack.c.l.b16 %v364
    %v404 = vunpack.c.l.b16 %v365
    %v405 = vunpack.c.l.b16 %v366
    %v406 = vunpack.c.l.b16 %v367
    %v407 = vunpack.c.l.b16 %v368
    %v408 = vunpack.c.l.b16 %v369
    %v409 = vunpack.c.l.b16 %v370
    %v410 = vunpack.c.l.b16 %v371
    %v411 = vunpack.c.l.b16 %v372
    %v412 = vunpack.c.l.b16 %v373
    %v413 = vunpack.c.l.b16 %v374
    %v414 = vunpack.c.l.b16 %v375
    %v415 = vpack.c.b16 %v400, %v399
    %v416 = vpack.c.b16 %v402, %v401
    %v417 = vpack.c.b16 %v404, %v403
    %v418 = vpack.c.b16 %v406, %v405
    %v419 = vpack.c.b16 %v408, %v407
    %v420 = vpack.c.b16 %v410, %v409
    %v421 = vpack.c.b16 %v412, %v411
    %v422 = vpack.c.b16 %v414, %v413
    %431 = vmatprep.subr.bf16.mxu0 0
    %432 = vmatpush1.bf16.msra.mxu0 %v422
    %433 = vmatprep.subr.bf16.mxu0 0
    %434 = vmatpush1.bf16.msra.mxu0 %v421
    %435 = vmatprep.subr.bf16.mxu0 0
    %436 = vmatpush1.bf16.msra.mxu0 %v420
    %437 = vmatprep.subr.bf16.mxu0 0
    %438 = vmatpush1.bf16.msra.mxu0 %v419
    %439 = vmatprep.subr.bf16.mxu0 0
    %440 = vmatpush1.bf16.msra.mxu0 %v418
    %441 = vmatprep.subr.bf16.mxu0 0
    %442 = vmatpush1.bf16.msra.mxu0 %v417
    %443 = vmatprep.subr.bf16.mxu0 0
    %444 = vmatpush1.bf16.msra.mxu0 %v416
    %445 = vmatprep.subr.bf16.mxu0 0
    %446 = vmatpush1.bf16.msra.mxu0 %v415
    %447 = vmatprep.subr.bf16.mxu0 0
    %448 = vmatpush2.bf16.msra.mxu0 0
    %449 = vmatprep.subr.bf16.mxu0 0
    %450 = vmatpush2.bf16.msra.mxu0 0
    %451 = vmatprep.subr.bf16.mxu0 0
    %452 = vmatpush2.bf16.msra.mxu0 0
    %453 = vmatprep.subr.bf16.mxu0 0
    %454 = vmatpush2.bf16.msra.mxu0 0
    %455 = vmatprep.subr.bf16.mxu0 0
    %456 = vmatpush2.bf16.msra.mxu0 0
    %457 = vmatprep.subr.bf16.mxu0 0
    %458 = vmatpush2.bf16.msra.mxu0 0
    %459 = vmatprep.subr.bf16.mxu0 0
    %460 = vmatpush2.bf16.msra.mxu0 0
    %461 = vmatprep.subr.bf16.mxu0 0
    %462 = vmatpush2.bf16.msra.mxu0 0
    %463 = vmatprep.mubr.bf16.mxu0 0
    %464 = vmatmul.mubr.bf16.gmra.mxu0 %v359
    %v465 = vpop.f32.mrf.mxu0
    %v466 = vadd.f32 %v381, %v465
    %v467 = vpop.f32.mrf.mxu0
    %v468 = vpop.f32.mrf.mxu0
    %v469 = vadd.f32 %v381, %v468
    %v470 = vpop.f32.mrf.mxu0
    %471 = vdwg.mxu0
    %472 = vst [vmem:[%s7] sm:$0xff] %v466
    %473 = vst [vmem:[%s7 + $0x8] sm:$0xff] %v469
    // Predicated region
    $region50: #{fc_head_net.1} parent=1 // pred_check
      _
    $region51: #{fc_head_net.1} parent=1 // pred_check_branch
      %475 = sbr.rel (0) target = $region53
    $region52: #{fc_head_net.1} parent=1 // pred_region
      _
    $region53: #{fc_head_net.1} parent=1 // pred_fallthru
      _
    // Predicated region
    $region54: #{fc_head_net.1} parent=1 // pred_check
      _
    $region55: #{fc_head_net.1} parent=1 // pred_check_branch
      %477 = sbr.rel (0) target = $region57
    $region56: #{fc_head_net.1} parent=1 // pred_region
      _
    $region57: #{fc_head_net.1} parent=1 // pred_fallthru
      _
    %478 = vsyncpa [#allocation3], 1
    %479 = vsyncpa [#allocation5], 1
    %480 = vsyncpa [#allocation8], 1

</llo_original>
